<compile_context>
chip_gen: v7x
topology: tpu7x:2x2x1
jax: 0.10.0
libtpu: 0.0.40
codegen_flags: <defaults>
</compile_context>

<pallas_src>
import functools

import jax
import jax.numpy as jnp
from jax.experimental import pallas as pl
from jax.experimental.pallas import tpu as pltpu

EPS = 1e-8


def _round_up(x, m):
    return (x + m - 1) // m * m


def _cdiv(a, b):
    return (a + b - 1) // b


def _input_stream_budget_bytes():
    """VMEM budget for the 3 double-buffered input streams, per generation."""
    try:
        kind = jax.devices()[0].device_kind.lower()
    except Exception:
        kind = ""
    if "v5 lite" in kind or "v5e" in kind or "v5lite" in kind:
        return 12 << 20   # v5e: stay near the 16 MiB scoped default
    if "v6" in kind or "trillium" in kind:
        return 32 << 20   # v6e: 128 MiB physical VMEM
    if "v7" in kind:
        return 28 << 20   # v7x: only 64 MiB VMEM but 3.2 TB/s HBM wants big tiles
    try:
        cap = int(pltpu.get_tpu_info().vmem_capacity_bytes)
    except Exception:
        cap = 64 << 20
    return int(max(8 << 20, min(28 << 20, cap // 3)))


def _choose_tb(batch, sublane):
    """Row-tile size: a multiple of the native sublane tile, and (when the batch
    allows it) small enough that the 'parallel' B axis has >=2 tiles so both
    v7x TensorCores get work."""
    if batch <= sublane:
        return batch                               # single full-dim tile
    return min(128, _round_up(_cdiv(batch, 2), sublane))


def _sim_kernel(temperature, d_total, td, mask_tail,
                f1_ref, f2_ref, f3_ref, out_ref, acc_ref):
    # Grid = (B tiles "parallel", D tiles "arbitrary").
    # acc_ref: (TB, 8) f32 — lanes 0..4 hold [f1·f2, f1·f3, |f1|^2, |f2|^2, |f3|^2].
    k = pl.program_id(1)

    @pl.when(k == 0)
    def _init():
        acc_ref[...] = jnp.zeros_like(acc_ref)

    a = f1_ref[...].astype(jnp.float32)
    b = f2_ref[...].astype(jnp.float32)
    c = f3_ref[...].astype(jnp.float32)

    if mask_tail:
        # Ragged D tail: zero columns past the true feature dim instead of
        # materializing padded copies of f1/f2/f3 in HBM.
        col = jax.lax.broadcasted_iota(jnp.int32, a.shape, 1) + k * td
        valid = col < d_total
        zero = jnp.float32(0.0)
        a = jnp.where(valid, a, zero)
        b = jnp.where(valid, b, zero)
        c = jnp.where(valid, c, zero)

    p12 = jnp.sum(a * b, axis=-1, keepdims=True)
    p13 = jnp.sum(a * c, axis=-1, keepdims=True)
    p11 = jnp.sum(a * a, axis=-1, keepdims=True)
    p22 = jnp.sum(b * b, axis=-1, keepdims=True)
    p33 = jnp.sum(c * c, axis=-1, keepdims=True)

    # One (TB, 8) load/add/store per D step (merged accumulators).
    lane = jax.lax.broadcasted_iota(jnp.int32, (p12.shape[0], 8), 1)
    part = jnp.where(lane == 0, p12,
           jnp.where(lane == 1, p13,
           jnp.where(lane == 2, p11,
           jnp.where(lane == 3, p22,
           jnp.where(lane == 4, p33, 0.0)))))
    acc_ref[...] += part

    @pl.when(k == pl.num_programs(1) - 1)
    def _finalize():
        acc = acc_ref[...]
        d12, d13 = acc[:, 0:1], acc[:, 1:2]
        s1, s2, s3 = acc[:, 2:3], acc[:, 3:4], acc[:, 4:5]
        temp = jnp.float32(temperature)
        eps2 = jnp.float32(EPS * EPS)
        # torch: cos = dot / max(||a||*||b||, eps) = dot / sqrt(max(ss_a*ss_b, eps^2))
        den12 = jnp.sqrt(jnp.maximum(s1 * s2, eps2)) * temp
        den13 = jnp.sqrt(jnp.maximum(s1 * s3, eps2)) * temp
        pos = d12 * pl.reciprocal(den12, approx=False)
        neg = d13 * pl.reciprocal(den13, approx=False)
        lane2 = jax.lax.broadcasted_iota(jnp.int32, (pos.shape[0], 2), 1)
        out_ref[...] = jnp.where(lane2 == 0, pos, neg)   # single (TB, 2) store


def eval_loss(f1, f2, f3, *, temperature=0.7, _max_td=None):
    """f1, f2, f3: (B, D). Returns (loss, cos_sim) with cos_sim shape (1, 2B).

    The cross-entropy path follows the PyTorch module exactly as written: a
    single (1, 2B) logit row against label 0 (only torch-valid for B == 1),
    i.e. loss = logsumexp(logits) - logits[0, 0].
    """
    B, D = f1.shape
    assert f2.shape == (B, D) and f3.shape == (B, D)
    itemsize = jnp.dtype(f1.dtype).itemsize

    # --- tiling (no host-side padding; ragged tiles handled in-kernel) ------
    sublane = max(8, 32 // itemsize)       # 8 (f32) / 16 (bf16) / 32 (int8/fp8)
    TB = _choose_tb(B, sublane)
    nb = _cdiv(B, TB)

    budget = _input_stream_budget_bytes()  # 3 inputs x 2 pipeline buffers
    td_cap = max(128, (budget // (3 * 2 * TB * itemsize)) // 128 * 128)
    if _max_td is not None:                # testing hook to force ragged D tiles
        td_cap = min(td_cap, _max_td)
    if D <= td_cap:
        TD, nd = D, 1                      # full-dim D tile (no 128 constraint)
    else:
        TD, nd = td_cap, _cdiv(D, td_cap)
    mask_tail = (nd > 1) and (D % TD != 0)

    used = 3 * 2 * TB * TD * itemsize
    vmem_limit = int(min(used + (8 << 20), 100 << 20))

    kernel = functools.partial(_sim_kernel, float(temperature), D, TD, mask_tail)

    pairs = pl.pallas_call(
        kernel,
        out_shape=jax.ShapeDtypeStruct((B, 2), jnp.float32),
        grid_spec=pltpu.PrefetchScalarGridSpec(
            num_scalar_prefetch=0,
            grid=(nb, nd),
            in_specs=[
                pl.BlockSpec((TB, TD), lambda i, k: (i, k)),
                pl.BlockSpec((TB, TD), lambda i, k: (i, k)),
                pl.BlockSpec((TB, TD), lambda i, k: (i, k)),
            ],
            out_specs=pl.BlockSpec((TB, 2), lambda i, k: (i, 0)),
            scratch_shapes=[pltpu.VMEM((TB, 8), jnp.float32)],
        ),
        compiler_params=pltpu.CompilerParams(
            dimension_semantics=("parallel", "arbitrary"),
            vmem_limit_bytes=vmem_limit,
        ),
        cost_estimate=pl.CostEstimate(
            flops=10 * B * D,
            transcendentals=0,
            bytes_accessed=3 * B * D * itemsize + B * 2 * 4,
        ),
    )(f1, f2, f3)

    # torch: cat([cos_sim, cos_sim_neg], 0).unsqueeze(0) -> (1, 2B)
    cos_sim = jnp.concatenate([pairs[:, 0], pairs[:, 1]], axis=0)[None, :]
    # CrossEntropy of the single logit row against label 0 — plain JAX (fused
    # by XLA); no second pallas_call / HBM round-trip needed.
    loss = jax.nn.logsumexp(cos_sim, axis=-1)[0] - cos_sim[0, 0]
    return loss, cos_sim


def _reference(f1, f2, f3, temperature=0.7):
    """Pure-JAX reference mirroring the PyTorch module (B==1-valid CE path)."""
    f1 = f1.astype(jnp.float32)
    f2 = f2.astype(jnp.float32)
    f3 = f3.astype(jnp.float32)

    def cos(a, b):
        dot = jnp.sum(a * b, axis=-1)
        den = jnp.sqrt(jnp.sum(a * a, -1)) * jnp.sqrt(jnp.sum(b * b, -1))
        return dot / jnp.maximum(den, EPS)

    pos = cos(f1, f2) / temperature
    neg = cos(f1, f3) / temperature
    logits = jnp.concatenate([pos, neg], axis=0)[None, :]
    loss = jax.nn.logsumexp(logits, axis=-1)[0] - logits[0, 0]
    return loss, logits


if __name__ == "__main__":
    key = jax.random.PRNGKey(0)
    k1, k2, k3, k4, k5, k6 = jax.random.split(key, 6)

    eval_fn = jax.jit(eval_loss, static_argnames=("temperature", "_max_td"))

    # Small deterministic shapes consistent with the module: batch=2, hidden=32.
    B, D = 2, 32
    f1 = jax.random.normal(k1, (B, D), dtype=jnp.float32)
    f2 = jax.random.normal(k2, (B, D), dtype=jnp.float32)
    f3 = jax.random.normal(k3, (B, D), dtype=jnp.float32)

    loss, cos_sim = eval_fn(f1, f2, f3)
    loss = jax.block_until_ready(loss)
    cos_sim = jax.block_until_ready(cos_sim)

    ref_loss, ref_cos = _reference(f1, f2, f3)
    assert cos_sim.shape == (1, 2 * B), cos_sim.shape
    assert jnp.allclose(cos_sim, ref_cos, atol=1e-4, rtol=1e-4), (cos_sim, ref_cos)
    assert jnp.allclose(loss, ref_loss, atol=1e-4, rtol=1e-4), (loss, ref_loss)

    # Exercise the ragged-B tiles and the masked ragged-D tail path.
    B2, D2 = 10, 300
    g1 = jax.random.normal(k4, (B2, D2), dtype=jnp.float32)
    g2 = jax.random.normal(k5, (B2, D2), dtype=jnp.float32)
    g3 = jax.random.normal(k6, (B2, D2), dtype=jnp.float32)
    loss2, cos2 = eval_fn(g1, g2, g3, _max_td=128)
    loss2 = jax.block_until_ready(loss2)
    cos2 = jax.block_until_ready(cos2)
    ref_loss2, ref_cos2 = _reference(g1, g2, g3)
    assert jnp.allclose(cos2, ref_cos2, atol=1e-4, rtol=1e-4), (cos2, ref_cos2)
    assert jnp.allclose(loss2, ref_loss2, atol=1e-4, rtol=1e-4), (loss2, ref_loss2)

    print("KERNEL_OK")
</pallas_src>

<mosaic_0001>
module attributes {stable_mosaic.version = 11 : i64} {
  func.func @_sim_kernel(%arg0: i32, %arg1: i32, %arg2: memref<2x32xf32, #tpu.memory_space<vmem>>, %arg3: memref<2x32xf32, #tpu.memory_space<vmem>>, %arg4: memref<2x32xf32, #tpu.memory_space<vmem>>, %arg5: memref<2x2xf32, #tpu.memory_space<vmem>>, %arg6: memref<2x8xf32, #tpu.memory_space<vmem>>) attributes {dimension_semantics = [#tpu.dimension_semantics<parallel>, #tpu.dimension_semantics<arbitrary>], iteration_bounds = array<i64: 1, 1>, scalar_prefetch = 0 : i64, scratch_operands = 1 : i64, tpu.core_type = #tpu.core_type<tc>, window_params = [{transform_indices = @transform_0, window_bounds = array<i64: 2, 32>}, {transform_indices = @transform_1, window_bounds = array<i64: 2, 32>}, {transform_indices = @transform_2, window_bounds = array<i64: 2, 32>}, {transform_indices = @transform_3, window_bounds = array<i64: 2, 2>}]} {
    %c0_i32 = arith.constant 0 : i32
    %0 = arith.cmpi eq, %arg1, %c0_i32 : i32
    %1 = arith.extui %0 : i1 to i32
    %c0_i32_0 = arith.constant 0 : i32
    %2 = arith.cmpi ne, %1, %c0_i32_0 : i32
    scf.if %2 {
      %cst_18 = arith.constant 0.000000e+00 : f32
      %54 = vector.broadcast %cst_18 : f32 to vector<2x8xf32>
      %c0_19 = arith.constant 0 : index
      %c0_20 = arith.constant 0 : index
      %55 = vector.load %arg6[%c0_19, %c0_20] : memref<2x8xf32, #tpu.memory_space<vmem>>, vector<2x8xf32>
      tpu.vector_store %arg6[%c0_19, %c0_20], %54 {strides = array<i32>} : memref<2x8xf32, #tpu.memory_space<vmem>>, vector<2x8xf32>,
    } else {
    }
    %c0 = arith.constant 0 : index
    %c0_1 = arith.constant 0 : index
    %3 = vector.load %arg2[%c0, %c0_1] : memref<2x32xf32, #tpu.memory_space<vmem>>, vector<2x32xf32>
    %c0_2 = arith.constant 0 : index
    %c0_3 = arith.constant 0 : index
    %4 = vector.load %arg3[%c0_2, %c0_3] : memref<2x32xf32, #tpu.memory_space<vmem>>, vector<2x32xf32>
    %c0_4 = arith.constant 0 : index
    %c0_5 = arith.constant 0 : index
    %5 = vector.load %arg4[%c0_4, %c0_5] : memref<2x32xf32, #tpu.memory_space<vmem>>, vector<2x32xf32>
    %6 = arith.mulf %3, %4 : vector<2x32xf32>
    %cst = arith.constant dense<0.000000e+00> : vector<2xf32>
    %7 = vector.multi_reduction <add>, %6, %cst [1] : vector<2x32xf32> to vector<2xf32>
    %8 = vector.shape_cast %7 : vector<2xf32> to vector<2x1xf32>
    %9 = arith.mulf %3, %5 : vector<2x32xf32>
    %cst_6 = arith.constant dense<0.000000e+00> : vector<2xf32>
    %10 = vector.multi_reduction <add>, %9, %cst_6 [1] : vector<2x32xf32> to vector<2xf32>
    %11 = vector.shape_cast %10 : vector<2xf32> to vector<2x1xf32>
    %12 = arith.mulf %3, %3 : vector<2x32xf32>
    %cst_7 = arith.constant dense<0.000000e+00> : vector<2xf32>
    %13 = vector.multi_reduction <add>, %12, %cst_7 [1] : vector<2x32xf32> to vector<2xf32>
    %14 = vector.shape_cast %13 : vector<2xf32> to vector<2x1xf32>
    %15 = arith.mulf %4, %4 : vector<2x32xf32>
    %cst_8 = arith.constant dense<0.000000e+00> : vector<2xf32>
    %16 = vector.multi_reduction <add>, %15, %cst_8 [1] : vector<2x32xf32> to vector<2xf32>
    %17 = vector.shape_cast %16 : vector<2xf32> to vector<2x1xf32>
    %18 = arith.mulf %5, %5 : vector<2x32xf32>
    %cst_9 = arith.constant dense<0.000000e+00> : vector<2xf32>
    %19 = vector.multi_reduction <add>, %18, %cst_9 [1] : vector<2x32xf32> to vector<2xf32>
    %20 = vector.shape_cast %19 : vector<2xf32> to vector<2x1xf32>
    %21 = tpu.iota {dimensions = array<i32: 1>} : vector<2x8xi32>
    %c0_i32_10 = arith.constant 0 : i32
    %22 = vector.broadcast %c0_i32_10 : i32 to vector<2x8xi32>
    %23 = arith.cmpi eq, %21, %22 : vector<2x8xi32>
    %c1_i32 = arith.constant 1 : i32
    %24 = vector.broadcast %c1_i32 : i32 to vector<2x8xi32>
    %25 = arith.cmpi eq, %21, %24 : vector<2x8xi32>
    %c2_i32 = arith.constant 2 : i32
    %26 = vector.broadcast %c2_i32 : i32 to vector<2x8xi32>
    %27 = arith.cmpi eq, %21, %26 : vector<2x8xi32>
    %c3_i32 = arith.constant 3 : i32
    %28 = vector.broadcast %c3_i32 : i32 to vector<2x8xi32>
    %29 = arith.cmpi eq, %21, %28 : vector<2x8xi32>
    %c4_i32 = arith.constant 4 : i32
    %30 = vector.broadcast %c4_i32 : i32 to vector<2x8xi32>
    %31 = arith.cmpi eq, %21, %30 : vector<2x8xi32>
    %cst_11 = arith.constant 0.000000e+00 : f32
    %32 = vector.shape_cast %20 : vector<2x1xf32> to vector<2x1xf32>
    %33 = vector.broadcast %32 : vector<2x1xf32> to vector<2x8xf32>
    %34 = vector.broadcast %cst_11 : f32 to vector<2x8xf32>
    %35 = arith.select %31, %33, %34 : vector<2x8xi1>, vector<2x8xf32>
    %36 = vector.shape_cast %17 : vector<2x1xf32> to vector<2x1xf32>
    %37 = vector.broadcast %36 : vector<2x1xf32> to vector<2x8xf32>
    %38 = arith.select %29, %37, %35 : vector<2x8xi1>, vector<2x8xf32>
    %39 = vector.shape_cast %14 : vector<2x1xf32> to vector<2x1xf32>
    %40 = vector.broadcast %39 : vector<2x1xf32> to vector<2x8xf32>
    %41 = arith.select %27, %40, %38 : vector<2x8xi1>, vector<2x8xf32>
    %42 = vector.shape_cast %11 : vector<2x1xf32> to vector<2x1xf32>
    %43 = vector.broadcast %42 : vector<2x1xf32> to vector<2x8xf32>
    %44 = arith.select %25, %43, %41 : vector<2x8xi1>, vector<2x8xf32>
    %45 = vector.shape_cast %8 : vector<2x1xf32> to vector<2x1xf32>
    %46 = vector.broadcast %45 : vector<2x1xf32> to vector<2x8xf32>
    %47 = arith.select %23, %46, %44 : vector<2x8xi1>, vector<2x8xf32>
    %c0_12 = arith.constant 0 : index
    %c0_13 = arith.constant 0 : index
    %48 = vector.load %arg6[%c0_12, %c0_13] : memref<2x8xf32, #tpu.memory_space<vmem>>, vector<2x8xf32>
    %49 = arith.addf %48, %47 : vector<2x8xf32>
    %c0_14 = arith.constant 0 : index
    %c0_15 = arith.constant 0 : index
    %50 = vector.load %arg6[%c0_14, %c0_15] : memref<2x8xf32, #tpu.memory_space<vmem>>, vector<2x8xf32>
    tpu.vector_store %arg6[%c0_14, %c0_15], %49 {strides = array<i32>} : memref<2x8xf32, #tpu.memory_space<vmem>>, vector<2x8xf32>,
    %c0_i32_16 = arith.constant 0 : i32
    %51 = arith.cmpi eq, %arg1, %c0_i32_16 : i32
    %52 = arith.extui %51 : i1 to i32
    %c0_i32_17 = arith.constant 0 : i32
    %53 = arith.cmpi ne, %52, %c0_i32_17 : i32
    scf.if %53 {
      %c0_18 = arith.constant 0 : index
      %c0_19 = arith.constant 0 : index
      %54 = vector.load %arg6[%c0_18, %c0_19] : memref<2x8xf32, #tpu.memory_space<vmem>>, vector<2x8xf32>
      %55 = vector.extract_strided_slice %54 {offsets = [0, 0], sizes = [2, 1], strides = [1, 1]} : vector<2x8xf32> to vector<2x1xf32>
      %56 = vector.extract_strided_slice %54 {offsets = [0, 1], sizes = [2, 1], strides = [1, 1]} : vector<2x8xf32> to vector<2x1xf32>
      %57 = vector.extract_strided_slice %54 {offsets = [0, 2], sizes = [2, 1], strides = [1, 1]} : vector<2x8xf32> to vector<2x1xf32>
      %58 = vector.extract_strided_slice %54 {offsets = [0, 3], sizes = [2, 1], strides = [1, 1]} : vector<2x8xf32> to vector<2x1xf32>
      %59 = vector.extract_strided_slice %54 {offsets = [0, 4], sizes = [2, 1], strides = [1, 1]} : vector<2x8xf32> to vector<2x1xf32>
      %60 = arith.mulf %57, %58 : vector<2x1xf32>
      %cst_20 = arith.constant 1.000000e-16 : f32
      %61 = vector.broadcast %cst_20 : f32 to vector<2x1xf32>
      %62 = arith.maximumf %60, %61 : vector<2x1xf32>
      %63 = math.sqrt %62 : vector<2x1xf32>
      %cst_21 = arith.constant 0.699999988 : f32
      %64 = vector.broadcast %cst_21 : f32 to vector<2x1xf32>
      %65 = arith.mulf %63, %64 : vector<2x1xf32>
      %66 = arith.mulf %57, %59 : vector<2x1xf32>
      %cst_22 = arith.constant 1.000000e-16 : f32
      %67 = vector.broadcast %cst_22 : f32 to vector<2x1xf32>
      %68 = arith.maximumf %66, %67 : vector<2x1xf32>
      %69 = math.sqrt %68 : vector<2x1xf32>
      %cst_23 = arith.constant 0.699999988 : f32
      %70 = vector.broadcast %cst_23 : f32 to vector<2x1xf32>
      %71 = arith.mulf %69, %70 : vector<2x1xf32>
      %72 = tpu.reciprocal %65 : vector<2x1xf32> -> vector<2x1xf32>
      %73 = arith.mulf %55, %72 : vector<2x1xf32>
      %74 = tpu.reciprocal %71 : vector<2x1xf32> -> vector<2x1xf32>
      %75 = arith.mulf %56, %74 : vector<2x1xf32>
      %76 = tpu.iota {dimensions = array<i32: 1>} : vector<2x2xi32>
      %c0_i32_24 = arith.constant 0 : i32
      %77 = vector.broadcast %c0_i32_24 : i32 to vector<2x2xi32>
      %78 = arith.cmpi eq, %76, %77 : vector<2x2xi32>
      %79 = vector.shape_cast %73 : vector<2x1xf32> to vector<2x1xf32>
      %80 = vector.broadcast %79 : vector<2x1xf32> to vector<2x2xf32>
      %81 = vector.shape_cast %75 : vector<2x1xf32> to vector<2x1xf32>
      %82 = vector.broadcast %81 : vector<2x1xf32> to vector<2x2xf32>
      %83 = arith.select %78, %80, %82 : vector<2x2xi1>, vector<2x2xf32>
      %c0_25 = arith.constant 0 : index
      %c0_26 = arith.constant 0 : index
      %84 = vector.load %arg5[%c0_25, %c0_26] : memref<2x2xf32, #tpu.memory_space<vmem>>, vector<2x2xf32>
      tpu.vector_store %arg5[%c0_25, %c0_26], %83 {strides = array<i32>} : memref<2x2xf32, #tpu.memory_space<vmem>>, vector<2x2xf32>,
    } else {
    }
    return
  }
  func.func @transform_0(%arg0: i32, %arg1: i32) -> (i32, i32) {
    %c0_i32 = arith.constant 0 : i32
    return %arg0, %arg1 : i32, i32
  }
  func.func @transform_1(%arg0: i32, %arg1: i32) -> (i32, i32) {
    %c0_i32 = arith.constant 0 : i32
    return %arg0, %arg1 : i32, i32
  }
  func.func @transform_2(%arg0: i32, %arg1: i32) -> (i32, i32) {
    %c0_i32 = arith.constant 0 : i32
    return %arg0, %arg1 : i32, i32
  }
  func.func @transform_3(%arg0: i32, %arg1: i32) -> (i32, i32) {
    %c0_i32 = arith.constant 0 : i32
    %c0_i32_0 = arith.constant 0 : i32
    return %arg0, %c0_i32 : i32, i32
  }
}

</mosaic_0001>

<llo_original>
// kernel: eval_loss.1
$region0: #{eval_loss.1}
  #allocation0 [shape = 'u32[]', space=smem, size = 0x4, offset = 0x4, fixed_abs, tag = 'smem constant byte address 0x4 - core index']
  #allocation1 [shape = 'u32[144,128]{1,0:T(1,128)}', space=vmem, size = 0x12000, scoped, tag = 'internal scratch']
  #allocation2 [shape = 'f32[2,8]{1,0:T(2,128)}', space=vmem, size = 0x400, scoped, tag = 'scratch operand']
  %s0 = inlined_call_operand.hbm [shape: f32[2,32], index: 0, kind: input, shape index: {}]
  %s1 = inlined_call_operand.vmem [shape: f32[2,32], index: 1, kind: input, shape index: {}]
  %s2 = inlined_call_operand.vmem [shape: f32[2,32], index: 2, kind: input, shape index: {}]
  %s3 = inlined_call_operand.vmem [shape: f32[2,2], index: 3, kind: output, shape index: {}]
  %s4 = sld [smem:[#allocation0]]
  $region34: #{eval_loss.1} parent=0
    _
  %s6 = ssub.s32 1, %s4
  %s7 = scalar_select 0, %s6, %s4
  $region1: #{eval_loss.1} parent=0
    #allocation3 [shape = 'u8[1024]{0}', space=vmem, size = 0x400, scoped, tag = 'input window, operand 0, single buffered']
    #allocation4 [shape = 's32[1]{0}', space=sflag, size = 0x4, scoped, tag = 'scoped memory for eval_loss.1']
    %8 = vsyncpa [#allocation4], 0
    // Predicated region
    $region2: #{eval_loss.1} parent=1 // pred_check
      _
    $region3: #{eval_loss.1} parent=1 // pred_check_branch
      %10 = sbr.rel (0) target = $region5
    $region4: #{eval_loss.1} parent=1 // pred_region
      %s12 = ssub.s32 32, 32
      %13 = vsyncadd [#allocation4], %s12
      %s15 = sshll.u32 [#allocation3], 4
      %s16 = int_to_ptr.vmem [resolvable:$true] %s15
      %18 = dma.hbm_to_vmem [thread:$0]  %s0, 32, %s16, [#allocation4]
    $region5: #{eval_loss.1} parent=1 // pred_fallthru
      _
    // Predicated region
    $region6: #{eval_loss.1} parent=1 // pred_check
      _
    $region7: #{eval_loss.1} parent=1 // pred_check_branch
      %20 = sbr.rel (0) target = $region9
    $region8: #{eval_loss.1} parent=1 // pred_region
      _
    $region9: #{eval_loss.1} parent=1 // pred_fallthru
      _
    // Predicated region
    $region10: #{eval_loss.1} parent=1 // pred_check
      _
    $region11: #{eval_loss.1} parent=1 // pred_check_branch
      %22 = sbr.rel (0) target = $region13
    $region12: #{eval_loss.1} parent=1 // pred_region
      _
    $region13: #{eval_loss.1} parent=1 // pred_fallthru
      _
    // Predicated region
    $region14: #{eval_loss.1} parent=1 // pred_check
      _
    $region15: #{eval_loss.1} parent=1 // pred_check_branch
      %24 = sbr.rel (0) target = $region17
    $region16: #{eval_loss.1} parent=1 // pred_region
      %25 = dma.done [#allocation4], 32
    $region17: #{eval_loss.1} parent=1 // pred_fallthru
      _
    %p26 = scmp.eq.s32.totalorder 0, 0
    // Predicated region
    $region18: #{eval_loss.1} parent=1 // pred_check
      %p27 = pneg %p26
    $region19: #{eval_loss.1} parent=1 // pred_check_branch
      %29 = sbr.rel (%p27) target = $region21
    $region20: #{eval_loss.1} parent=1 // pred_region
      %vm30 = vcmask 58368
      %31 = vst.msk [vmem:[#allocation2] sm:$0x3] %vm30, 0.0
    $region21: #{eval_loss.1} parent=1 // pred_fallthru
      _
    %v32 = vld [vmem:[#allocation3] sm:$0x3]
    %v33 = vld [vmem:[%s1] sm:$0x3]
    %v34 = vld [vmem:[%s2] sm:$0x3]
    %v35 = vmul.f32 %v32, %v33
    %vm36 = vcmask 254976
    %v37 = vsel %vm36, %v35, 0.0
    %38 = vadd.xlane.f32.xlu0 %v37
    %v39 = vpop.xlane.xlu0 %38
    %v40 = vmul.f32 %v32, %v34
    %v41 = vsel %vm36, %v40, 0.0
    %42 = vadd.xlane.f32.xlu0 %v41
    %v43 = vpop.xlane.xlu0 %42
    %v44 = vmul.f32 %v32, %v32
    %v45 = vsel %vm36, %v44, 0.0
    %46 = vadd.xlane.f32.xlu0 %v45
    %v47 = vpop.xlane.xlu0 %46
    %v48 = vmul.f32 %v33, %v33
    %v49 = vsel %vm36, %v48, 0.0
    %50 = vadd.xlane.f32.xlu0 %v49
    %v51 = vpop.xlane.xlu0 %50
    %v52 = vmul.f32 %v34, %v34
    %v53 = vsel %vm36, %v52, 0.0
    %54 = vadd.xlane.f32.xlu0 %v53
    %v55 = vpop.xlane.xlu0 %54
    %v56 = vlaneseq
    %v57 = vand.u32 %v56, 127
    %vm58 = vcmp.eq.s32.totalorder %v57, 0
    %vm59 = vcmp.eq.s32.totalorder %v57, 1
    %vm60 = vcmp.eq.s32.totalorder %v57, 2
    %vm61 = vcmp.eq.s32.totalorder %v57, 3
    %vm62 = vcmp.eq.s32.totalorder %v57, 4
    %v63 = vsel %vm62, %v55, 0.0
    %v64 = vsel %vm61, %v51, %v63
    %v65 = vsel %vm60, %v47, %v64
    %v66 = vsel %vm59, %v43, %v65
    %v67 = vsel %vm58, %v39, %v66
    %v68 = vld [vmem:[#allocation2] sm:$0x3]
    %v69 = vadd.f32 %v68, %v67
    %vm70 = vcmask 58368
    %71 = vst.msk [vmem:[#allocation2] sm:$0x3] %vm70, %v69
    // Predicated region
    $region22: #{eval_loss.1} parent=1 // pred_check
      %p72 = pneg %p26
    $region23: #{eval_loss.1} parent=1 // pred_check_branch
      %74 = sbr.rel (%p72) target = $region25
    $region24: #{eval_loss.1} parent=1 // pred_region
      %v75 = vld [vmem:[#allocation2] sm:$0x3]
      %77 = vrot.lane.b32.xlu0 %v75, 127
      %v78 = vpop.permute.xlu0 %77
      %v80 = vmul.f32 %v75, %v78
      %v81 = vmax.f32 %v80, 1e-16
      %v82 = vrsqrt.pop %v81
      %v83 = vmul.f32 %v81, %v82
      %vm84 = vcmp.eq.f32.partialorder %v81, inf
      %v85 = vsel %vm84, %v81, %v83
      %vm86 = vcmp.eq.f32.partialorder %v81, 0.0
      %v87 = vand.u32 %v81, 2147483648
      %v88 = vsel %vm86, %v87, %v85
      %v89 = vmul.f32 %v88, 0.7
      %90 = vrot.lane.b32.xlu0 %v75, 126
      %v91 = vpop.permute.xlu0 %90
      %v93 = vmul.f32 %v75, %v91
      %v94 = vmax.f32 %v93, 1e-16
      %v95 = vrsqrt.pop %v94
      %v96 = vmul.f32 %v94, %v95
      %vm97 = vcmp.eq.f32.partialorder %v94, inf
      %v98 = vsel %vm97, %v94, %v96
      %vm99 = vcmp.eq.f32.partialorder %v94, 0.0
      %v100 = vand.u32 %v94, 2147483648
      %v101 = vsel %vm99, %v100, %v98
      %v102 = vmul.f32 %v101, 0.7
      %v103 = vrcp.pop %v89
      %105 = vrot.lane.b32.xlu0 %v103, 126
      %v106 = vpop.permute.xlu0 %105
      %v108 = vmul.f32 %v75, %v106
      %v109 = vrcp.pop %v102
      %111 = vrot.lane.b32.xlu0 %v109, 127
      %v112 = vpop.permute.xlu0 %111
      %v114 = vmul.f32 %v75, %v112
      %116 = vset.pattern.permute.xlu0 0
      %117 = vperm.xlu0 %116, %v108
      %v118 = vpop.permute.xlu0 %117
      %121 = vset.pattern.permute.xlu0 1
      %122 = vperm.xlu0 %121, %v114
      %v123 = vpop.permute.xlu0 %122
      %v125 = vsel %vm58, %v118, %v123
      %vm126 = vcmask 9216
      %127 = vst.msk [vmem:[%s3] sm:$0x3] %vm126, %v125
    $region25: #{eval_loss.1} parent=1 // pred_fallthru
      _
    // Predicated region
    $region26: #{eval_loss.1} parent=1 // pred_check
      _
    $region27: #{eval_loss.1} parent=1 // pred_check_branch
      %129 = sbr.rel (0) target = $region29
    $region28: #{eval_loss.1} parent=1 // pred_region
      _
    $region29: #{eval_loss.1} parent=1 // pred_fallthru
      _
    // Predicated region
    $region30: #{eval_loss.1} parent=1 // pred_check
      _
    $region31: #{eval_loss.1} parent=1 // pred_check_branch
      %131 = sbr.rel (0) target = $region33
    $region32: #{eval_loss.1} parent=1 // pred_region
      _
    $region33: #{eval_loss.1} parent=1 // pred_fallthru
      _
    %132 = vsyncpa [#allocation4], 1

</llo_original>
